<compile_context>
chip_gen: v5e
topology: v5e:2x2
jax: 0.10.0
libtpu: 0.0.40
codegen_flags: <defaults>
</compile_context>

<pallas_src>
import functools

import jax
import jax.numpy as jnp
from jax import lax
from jax.experimental import pallas as pl
from jax.experimental.pallas import tpu as pltpu

_LANES = 128           # vreg lane width: batch laid out lane-dense
_CHUNK_ROWS = 8        # sublane rows kept vreg-resident across the unrolled H loop
_MAX_BLOCK_ROWS = 512  # 512x128 f32 = 256 KiB tile; in+out double-buffered ~1 MiB VMEM


def _fitter_kernel(x_ref, w1_ref, b1_ref, w2_ref, b2_ref, y_ref, *,
                   hidden, activation, chunk_rows):
    # x_ref / y_ref : (block_rows, 128) f32 VMEM tiles, batch on sublanes+lanes.
    # w1_ref, b1_ref, w2_ref : (H,) f32 in SMEM; b2_ref : (1,) f32 in SMEM.
    block_rows = x_ref.shape[0]

    def compute_chunk(x):
        # Fold the output bias into the accumulator init; then a statically
        # unrolled loop over hidden units: per j a scalar-broadcast mul/add
        # (VPU), a tanh (EUP) and a scalar-broadcast FMA into the accumulator.
        acc = jnp.full_like(x, b2_ref[0])
        for j in range(hidden):
            acc = acc + w2_ref[j] * activation(w1_ref[j] * x + b1_ref[j])
        return acc

    num_chunks = block_rows // chunk_rows
    if num_chunks <= 1:
        # Small tile: whole block in one shot (x/acc already fit in vregs).
        y_ref[...] = compute_chunk(x_ref[...]).astype(y_ref.dtype)
    else:
        # Large tile: walk it in one-vreg-high chunks so x and acc stay
        # register-resident across all H iterations (one vst per chunk total).
        def body(c, carry):
            r0 = pl.multiple_of(c * chunk_rows, chunk_rows)
            x = x_ref[pl.ds(r0, chunk_rows), :]
            y_ref[pl.ds(r0, chunk_rows), :] = compute_chunk(x).astype(y_ref.dtype)
            return carry

        lax.fori_loop(0, num_chunks, body, 0)


def _pick_block_rows(total_rows):
    if total_rows <= _CHUNK_ROWS:
        return total_rows
    # Multiple of 8 sublanes, capped at _MAX_BLOCK_ROWS, and at most ~half the
    # rows so the "parallel" grid has >= 2 steps (keeps both v7x TCs busy).
    half = ((total_rows + 1) // 2 + _CHUNK_ROWS - 1) // _CHUNK_ROWS * _CHUNK_ROWS
    return max(_CHUNK_ROWS, min(_MAX_BLOCK_ROWS, half))


def fitter_forward(x, w1, b1, w2, b2, activation=jnp.tanh):
    """x: (B, 1); w1: (1, H); b1: (H,); w2: (H, 1); b2: (1,).  Returns (B, 1)."""
    B = x.shape[0]
    H = w1.shape[-1] if w1.ndim == 2 else w1.shape[0]

    # Flatten weights to 1-D for SMEM scalar reads.
    w1_flat = w1.reshape(H).astype(jnp.float32)
    b1_flat = b1.reshape(H).astype(jnp.float32)
    w2_flat = w2.reshape(H).astype(jnp.float32)
    b2_flat = b2.reshape(1).astype(jnp.float32)

    # Lane-dense layout: (B,) -> (rows, 128).  Pad only to the next lane
    # multiple, and only if B is ragged; ragged last row-blocks at the grid
    # boundary are masked by Pallas (OOB reads unspecified, OOB writes dropped),
    # so no block-sized padding / extra HBM pass is needed.
    rows = pl.cdiv(B, _LANES)
    b_lane = rows * _LANES
    x_flat = x.reshape(B).astype(jnp.float32)
    if b_lane != B:
        x_flat = jnp.pad(x_flat, (0, b_lane - B))
    x2d = x_flat.reshape(rows, _LANES)

    block_rows = _pick_block_rows(rows)
    chunk_rows = _CHUNK_ROWS if block_rows >= _CHUNK_ROWS else block_rows
    num_tiles = pl.cdiv(rows, block_rows)

    kernel = functools.partial(_fitter_kernel, hidden=H, activation=activation,
                               chunk_rows=chunk_rows)

    cost = pl.CostEstimate(
        flops=4 * B * H + B,        # mul/add/mul/add per hidden unit per sample
        transcendentals=B * H,      # one tanh per hidden unit per sample
        bytes_accessed=8 * B + 12 * H + 4,
    )

    y2d = pl.pallas_call(
        kernel,
        out_shape=jax.ShapeDtypeStruct((rows, _LANES), jnp.float32),
        grid=(num_tiles,),
        in_specs=[
            pl.BlockSpec((block_rows, _LANES), lambda i: (i, 0)),      # x tile (VMEM)
            pl.BlockSpec(memory_space=pltpu.MemorySpace.SMEM),         # w1
            pl.BlockSpec(memory_space=pltpu.MemorySpace.SMEM),         # b1
            pl.BlockSpec(memory_space=pltpu.MemorySpace.SMEM),         # w2
            pl.BlockSpec(memory_space=pltpu.MemorySpace.SMEM),         # b2
        ],
        out_specs=pl.BlockSpec((block_rows, _LANES), lambda i: (i, 0)),
        compiler_params=pltpu.CompilerParams(
            dimension_semantics=("parallel",),   # shard batch tiles across TCs (v7x)
        ),
        cost_estimate=cost,
    )(x2d, w1_flat, b1_flat, w2_flat, b2_flat)

    y_flat = y2d.reshape(b_lane)
    if b_lane != B:
        y_flat = y_flat[:B]
    return y_flat.reshape(B, 1)


def fitter_reference(x, w1, b1, w2, b2, activation=jnp.tanh):
    h = activation(x @ w1 + b1[None, :])
    return h @ w2 + b2[None, :]


if __name__ == "__main__":
    key = jax.random.PRNGKey(0)
    k_x, k_w1, k_b1, k_w2, k_b2 = jax.random.split(key, 5)

    H = 32  # numHiddenNodes

    # Deterministic init mimicking torch.nn.Linear (uniform +/- 1/sqrt(fan_in)),
    # stored transposed relative to PyTorch, i.e. as (in_features, out_features).
    bound1 = 1.0
    w1 = jax.random.uniform(k_w1, (1, H), minval=-bound1, maxval=bound1, dtype=jnp.float32)
    b1 = jax.random.uniform(k_b1, (H,), minval=-bound1, maxval=bound1, dtype=jnp.float32)
    bound2 = 1.0 / (float(H) ** 0.5)
    w2 = jax.random.uniform(k_w2, (H, 1), minval=-bound2, maxval=bound2, dtype=jnp.float32)
    b2 = jax.random.uniform(k_b2, (1,), minval=-bound2, maxval=bound2, dtype=jnp.float32)

    # B=8    : tiny ragged batch (single small block)
    # B=1200 : ragged batch, 2 tiles, masked boundary block
    # B=6144 : aligned batch (zero-copy wrapper path), 2 tiles x 3 vreg chunks
    for B in (8, 1200, 6144):
        xb = jax.random.normal(jax.random.fold_in(k_x, B), (B, 1), dtype=jnp.float32)
        y = jax.block_until_ready(fitter_forward(xb, w1, b1, w2, b2, activation=jnp.tanh))
        y_ref = fitter_reference(xb, w1, b1, w2, b2, activation=jnp.tanh)
        assert y.shape == (B, 1)
        assert jnp.allclose(y, y_ref, atol=1e-5, rtol=1e-5), (B, y, y_ref)

    print("KERNEL_OK")
</pallas_src>

<mosaic_0001>
module attributes {stable_mosaic.version = 11 : i64} {
  func.func @_fitter_kernel(%arg0: i32, %arg1: memref<1x128xf32, #tpu.memory_space<vmem>>, %arg2: memref<32xf32, #tpu.memory_space<smem>>, %arg3: memref<32xf32, #tpu.memory_space<smem>>, %arg4: memref<32xf32, #tpu.memory_space<smem>>, %arg5: memref<1xf32, #tpu.memory_space<smem>>, %arg6: memref<1x128xf32, #tpu.memory_space<vmem>>) attributes {dimension_semantics = [#tpu.dimension_semantics<parallel>], iteration_bounds = array<i64: 1>, scalar_prefetch = 0 : i64, scratch_operands = 0 : i64, tpu.core_type = #tpu.core_type<tc>, window_params = [{transform_indices = @transform_0, window_bounds = array<i64: 1, 128>}, {transform_indices = @transform_1, window_bounds = array<i64: 32>}, {transform_indices = @transform_2, window_bounds = array<i64: 32>}, {transform_indices = @transform_3, window_bounds = array<i64: 32>}, {transform_indices = @transform_4, window_bounds = array<i64: 1>}, {transform_indices = @transform_5, window_bounds = array<i64: 1, 128>}]} {
    %c0 = arith.constant 0 : index
    %c0_0 = arith.constant 0 : index
    %0 = vector.load %arg1[%c0, %c0_0] : memref<1x128xf32, #tpu.memory_space<vmem>>, vector<1x128xf32>
    %c0_1 = arith.constant 0 : index
    %1 = memref.load %arg5[%c0_1] : memref<1xf32, #tpu.memory_space<smem>>
    %2 = vector.broadcast %1 : f32 to vector<1x128xf32>
    %c0_2 = arith.constant 0 : index
    %3 = memref.load %arg4[%c0_2] : memref<32xf32, #tpu.memory_space<smem>>
    %c0_3 = arith.constant 0 : index
    %4 = memref.load %arg2[%c0_3] : memref<32xf32, #tpu.memory_space<smem>>
    %5 = vector.broadcast %4 : f32 to vector<1x128xf32>
    %6 = arith.mulf %5, %0 : vector<1x128xf32>
    %c0_4 = arith.constant 0 : index
    %7 = memref.load %arg3[%c0_4] : memref<32xf32, #tpu.memory_space<smem>>
    %8 = vector.broadcast %7 : f32 to vector<1x128xf32>
    %9 = arith.addf %6, %8 : vector<1x128xf32>
    %10 = math.tanh %9 : vector<1x128xf32>
    %11 = vector.broadcast %3 : f32 to vector<1x128xf32>
    %12 = arith.mulf %11, %10 : vector<1x128xf32>
    %13 = arith.addf %2, %12 : vector<1x128xf32>
    %c1 = arith.constant 1 : index
    %14 = memref.load %arg4[%c1] : memref<32xf32, #tpu.memory_space<smem>>
    %c1_5 = arith.constant 1 : index
    %15 = memref.load %arg2[%c1_5] : memref<32xf32, #tpu.memory_space<smem>>
    %16 = vector.broadcast %15 : f32 to vector<1x128xf32>
    %17 = arith.mulf %16, %0 : vector<1x128xf32>
    %c1_6 = arith.constant 1 : index
    %18 = memref.load %arg3[%c1_6] : memref<32xf32, #tpu.memory_space<smem>>
    %19 = vector.broadcast %18 : f32 to vector<1x128xf32>
    %20 = arith.addf %17, %19 : vector<1x128xf32>
    %21 = math.tanh %20 : vector<1x128xf32>
    %22 = vector.broadcast %14 : f32 to vector<1x128xf32>
    %23 = arith.mulf %22, %21 : vector<1x128xf32>
    %24 = arith.addf %13, %23 : vector<1x128xf32>
    %c2 = arith.constant 2 : index
    %25 = memref.load %arg4[%c2] : memref<32xf32, #tpu.memory_space<smem>>
    %c2_7 = arith.constant 2 : index
    %26 = memref.load %arg2[%c2_7] : memref<32xf32, #tpu.memory_space<smem>>
    %27 = vector.broadcast %26 : f32 to vector<1x128xf32>
    %28 = arith.mulf %27, %0 : vector<1x128xf32>
    %c2_8 = arith.constant 2 : index
    %29 = memref.load %arg3[%c2_8] : memref<32xf32, #tpu.memory_space<smem>>
    %30 = vector.broadcast %29 : f32 to vector<1x128xf32>
    %31 = arith.addf %28, %30 : vector<1x128xf32>
    %32 = math.tanh %31 : vector<1x128xf32>
    %33 = vector.broadcast %25 : f32 to vector<1x128xf32>
    %34 = arith.mulf %33, %32 : vector<1x128xf32>
    %35 = arith.addf %24, %34 : vector<1x128xf32>
    %c3 = arith.constant 3 : index
    %36 = memref.load %arg4[%c3] : memref<32xf32, #tpu.memory_space<smem>>
    %c3_9 = arith.constant 3 : index
    %37 = memref.load %arg2[%c3_9] : memref<32xf32, #tpu.memory_space<smem>>
    %38 = vector.broadcast %37 : f32 to vector<1x128xf32>
    %39 = arith.mulf %38, %0 : vector<1x128xf32>
    %c3_10 = arith.constant 3 : index
    %40 = memref.load %arg3[%c3_10] : memref<32xf32, #tpu.memory_space<smem>>
    %41 = vector.broadcast %40 : f32 to vector<1x128xf32>
    %42 = arith.addf %39, %41 : vector<1x128xf32>
    %43 = math.tanh %42 : vector<1x128xf32>
    %44 = vector.broadcast %36 : f32 to vector<1x128xf32>
    %45 = arith.mulf %44, %43 : vector<1x128xf32>
    %46 = arith.addf %35, %45 : vector<1x128xf32>
    %c4 = arith.constant 4 : index
    %47 = memref.load %arg4[%c4] : memref<32xf32, #tpu.memory_space<smem>>
    %c4_11 = arith.constant 4 : index
    %48 = memref.load %arg2[%c4_11] : memref<32xf32, #tpu.memory_space<smem>>
    %49 = vector.broadcast %48 : f32 to vector<1x128xf32>
    %50 = arith.mulf %49, %0 : vector<1x128xf32>
    %c4_12 = arith.constant 4 : index
    %51 = memref.load %arg3[%c4_12] : memref<32xf32, #tpu.memory_space<smem>>
    %52 = vector.broadcast %51 : f32 to vector<1x128xf32>
    %53 = arith.addf %50, %52 : vector<1x128xf32>
    %54 = math.tanh %53 : vector<1x128xf32>
    %55 = vector.broadcast %47 : f32 to vector<1x128xf32>
    %56 = arith.mulf %55, %54 : vector<1x128xf32>
    %57 = arith.addf %46, %56 : vector<1x128xf32>
    %c5 = arith.constant 5 : index
    %58 = memref.load %arg4[%c5] : memref<32xf32, #tpu.memory_space<smem>>
    %c5_13 = arith.constant 5 : index
    %59 = memref.load %arg2[%c5_13] : memref<32xf32, #tpu.memory_space<smem>>
    %60 = vector.broadcast %59 : f32 to vector<1x128xf32>
    %61 = arith.mulf %60, %0 : vector<1x128xf32>
    %c5_14 = arith.constant 5 : index
    %62 = memref.load %arg3[%c5_14] : memref<32xf32, #tpu.memory_space<smem>>
    %63 = vector.broadcast %62 : f32 to vector<1x128xf32>
    %64 = arith.addf %61, %63 : vector<1x128xf32>
    %65 = math.tanh %64 : vector<1x128xf32>
    %66 = vector.broadcast %58 : f32 to vector<1x128xf32>
    %67 = arith.mulf %66, %65 : vector<1x128xf32>
    %68 = arith.addf %57, %67 : vector<1x128xf32>
    %c6 = arith.constant 6 : index
    %69 = memref.load %arg4[%c6] : memref<32xf32, #tpu.memory_space<smem>>
    %c6_15 = arith.constant 6 : index
    %70 = memref.load %arg2[%c6_15] : memref<32xf32, #tpu.memory_space<smem>>
    %71 = vector.broadcast %70 : f32 to vector<1x128xf32>
    %72 = arith.mulf %71, %0 : vector<1x128xf32>
    %c6_16 = arith.constant 6 : index
    %73 = memref.load %arg3[%c6_16] : memref<32xf32, #tpu.memory_space<smem>>
    %74 = vector.broadcast %73 : f32 to vector<1x128xf32>
    %75 = arith.addf %72, %74 : vector<1x128xf32>
    %76 = math.tanh %75 : vector<1x128xf32>
    %77 = vector.broadcast %69 : f32 to vector<1x128xf32>
    %78 = arith.mulf %77, %76 : vector<1x128xf32>
    %79 = arith.addf %68, %78 : vector<1x128xf32>
    %c7 = arith.constant 7 : index
    %80 = memref.load %arg4[%c7] : memref<32xf32, #tpu.memory_space<smem>>
    %c7_17 = arith.constant 7 : index
    %81 = memref.load %arg2[%c7_17] : memref<32xf32, #tpu.memory_space<smem>>
    %82 = vector.broadcast %81 : f32 to vector<1x128xf32>
    %83 = arith.mulf %82, %0 : vector<1x128xf32>
    %c7_18 = arith.constant 7 : index
    %84 = memref.load %arg3[%c7_18] : memref<32xf32, #tpu.memory_space<smem>>
    %85 = vector.broadcast %84 : f32 to vector<1x128xf32>
    %86 = arith.addf %83, %85 : vector<1x128xf32>
    %87 = math.tanh %86 : vector<1x128xf32>
    %88 = vector.broadcast %80 : f32 to vector<1x128xf32>
    %89 = arith.mulf %88, %87 : vector<1x128xf32>
    %90 = arith.addf %79, %89 : vector<1x128xf32>
    %c8 = arith.constant 8 : index
    %91 = memref.load %arg4[%c8] : memref<32xf32, #tpu.memory_space<smem>>
    %c8_19 = arith.constant 8 : index
    %92 = memref.load %arg2[%c8_19] : memref<32xf32, #tpu.memory_space<smem>>
    %93 = vector.broadcast %92 : f32 to vector<1x128xf32>
    %94 = arith.mulf %93, %0 : vector<1x128xf32>
    %c8_20 = arith.constant 8 : index
    %95 = memref.load %arg3[%c8_20] : memref<32xf32, #tpu.memory_space<smem>>
    %96 = vector.broadcast %95 : f32 to vector<1x128xf32>
    %97 = arith.addf %94, %96 : vector<1x128xf32>
    %98 = math.tanh %97 : vector<1x128xf32>
    %99 = vector.broadcast %91 : f32 to vector<1x128xf32>
    %100 = arith.mulf %99, %98 : vector<1x128xf32>
    %101 = arith.addf %90, %100 : vector<1x128xf32>
    %c9 = arith.constant 9 : index
    %102 = memref.load %arg4[%c9] : memref<32xf32, #tpu.memory_space<smem>>
    %c9_21 = arith.constant 9 : index
    %103 = memref.load %arg2[%c9_21] : memref<32xf32, #tpu.memory_space<smem>>
    %104 = vector.broadcast %103 : f32 to vector<1x128xf32>
    %105 = arith.mulf %104, %0 : vector<1x128xf32>
    %c9_22 = arith.constant 9 : index
    %106 = memref.load %arg3[%c9_22] : memref<32xf32, #tpu.memory_space<smem>>
    %107 = vector.broadcast %106 : f32 to vector<1x128xf32>
    %108 = arith.addf %105, %107 : vector<1x128xf32>
    %109 = math.tanh %108 : vector<1x128xf32>
    %110 = vector.broadcast %102 : f32 to vector<1x128xf32>
    %111 = arith.mulf %110, %109 : vector<1x128xf32>
    %112 = arith.addf %101, %111 : vector<1x128xf32>
    %c10 = arith.constant 10 : index
    %113 = memref.load %arg4[%c10] : memref<32xf32, #tpu.memory_space<smem>>
    %c10_23 = arith.constant 10 : index
    %114 = memref.load %arg2[%c10_23] : memref<32xf32, #tpu.memory_space<smem>>
    %115 = vector.broadcast %114 : f32 to vector<1x128xf32>
    %116 = arith.mulf %115, %0 : vector<1x128xf32>
    %c10_24 = arith.constant 10 : index
    %117 = memref.load %arg3[%c10_24] : memref<32xf32, #tpu.memory_space<smem>>
    %118 = vector.broadcast %117 : f32 to vector<1x128xf32>
    %119 = arith.addf %116, %118 : vector<1x128xf32>
    %120 = math.tanh %119 : vector<1x128xf32>
    %121 = vector.broadcast %113 : f32 to vector<1x128xf32>
    %122 = arith.mulf %121, %120 : vector<1x128xf32>
    %123 = arith.addf %112, %122 : vector<1x128xf32>
    %c11 = arith.constant 11 : index
    %124 = memref.load %arg4[%c11] : memref<32xf32, #tpu.memory_space<smem>>
    %c11_25 = arith.constant 11 : index
    %125 = memref.load %arg2[%c11_25] : memref<32xf32, #tpu.memory_space<smem>>
    %126 = vector.broadcast %125 : f32 to vector<1x128xf32>
    %127 = arith.mulf %126, %0 : vector<1x128xf32>
    %c11_26 = arith.constant 11 : index
    %128 = memref.load %arg3[%c11_26] : memref<32xf32, #tpu.memory_space<smem>>
    %129 = vector.broadcast %128 : f32 to vector<1x128xf32>
    %130 = arith.addf %127, %129 : vector<1x128xf32>
    %131 = math.tanh %130 : vector<1x128xf32>
    %132 = vector.broadcast %124 : f32 to vector<1x128xf32>
    %133 = arith.mulf %132, %131 : vector<1x128xf32>
    %134 = arith.addf %123, %133 : vector<1x128xf32>
    %c12 = arith.constant 12 : index
    %135 = memref.load %arg4[%c12] : memref<32xf32, #tpu.memory_space<smem>>
    %c12_27 = arith.constant 12 : index
    %136 = memref.load %arg2[%c12_27] : memref<32xf32, #tpu.memory_space<smem>>
    %137 = vector.broadcast %136 : f32 to vector<1x128xf32>
    %138 = arith.mulf %137, %0 : vector<1x128xf32>
    %c12_28 = arith.constant 12 : index
    %139 = memref.load %arg3[%c12_28] : memref<32xf32, #tpu.memory_space<smem>>
    %140 = vector.broadcast %139 : f32 to vector<1x128xf32>
    %141 = arith.addf %138, %140 : vector<1x128xf32>
    %142 = math.tanh %141 : vector<1x128xf32>
    %143 = vector.broadcast %135 : f32 to vector<1x128xf32>
    %144 = arith.mulf %143, %142 : vector<1x128xf32>
    %145 = arith.addf %134, %144 : vector<1x128xf32>
    %c13 = arith.constant 13 : index
    %146 = memref.load %arg4[%c13] : memref<32xf32, #tpu.memory_space<smem>>
    %c13_29 = arith.constant 13 : index
    %147 = memref.load %arg2[%c13_29] : memref<32xf32, #tpu.memory_space<smem>>
    %148 = vector.broadcast %147 : f32 to vector<1x128xf32>
    %149 = arith.mulf %148, %0 : vector<1x128xf32>
    %c13_30 = arith.constant 13 : index
    %150 = memref.load %arg3[%c13_30] : memref<32xf32, #tpu.memory_space<smem>>
    %151 = vector.broadcast %150 : f32 to vector<1x128xf32>
    %152 = arith.addf %149, %151 : vector<1x128xf32>
    %153 = math.tanh %152 : vector<1x128xf32>
    %154 = vector.broadcast %146 : f32 to vector<1x128xf32>
    %155 = arith.mulf %154, %153 : vector<1x128xf32>
    %156 = arith.addf %145, %155 : vector<1x128xf32>
    %c14 = arith.constant 14 : index
    %157 = memref.load %arg4[%c14] : memref<32xf32, #tpu.memory_space<smem>>
    %c14_31 = arith.constant 14 : index
    %158 = memref.load %arg2[%c14_31] : memref<32xf32, #tpu.memory_space<smem>>
    %159 = vector.broadcast %158 : f32 to vector<1x128xf32>
    %160 = arith.mulf %159, %0 : vector<1x128xf32>
    %c14_32 = arith.constant 14 : index
    %161 = memref.load %arg3[%c14_32] : memref<32xf32, #tpu.memory_space<smem>>
    %162 = vector.broadcast %161 : f32 to vector<1x128xf32>
    %163 = arith.addf %160, %162 : vector<1x128xf32>
    %164 = math.tanh %163 : vector<1x128xf32>
    %165 = vector.broadcast %157 : f32 to vector<1x128xf32>
    %166 = arith.mulf %165, %164 : vector<1x128xf32>
    %167 = arith.addf %156, %166 : vector<1x128xf32>
    %c15 = arith.constant 15 : index
    %168 = memref.load %arg4[%c15] : memref<32xf32, #tpu.memory_space<smem>>
    %c15_33 = arith.constant 15 : index
    %169 = memref.load %arg2[%c15_33] : memref<32xf32, #tpu.memory_space<smem>>
    %170 = vector.broadcast %169 : f32 to vector<1x128xf32>
    %171 = arith.mulf %170, %0 : vector<1x128xf32>
    %c15_34 = arith.constant 15 : index
    %172 = memref.load %arg3[%c15_34] : memref<32xf32, #tpu.memory_space<smem>>
    %173 = vector.broadcast %172 : f32 to vector<1x128xf32>
    %174 = arith.addf %171, %173 : vector<1x128xf32>
    %175 = math.tanh %174 : vector<1x128xf32>
    %176 = vector.broadcast %168 : f32 to vector<1x128xf32>
    %177 = arith.mulf %176, %175 : vector<1x128xf32>
    %178 = arith.addf %167, %177 : vector<1x128xf32>
    %c16 = arith.constant 16 : index
    %179 = memref.load %arg4[%c16] : memref<32xf32, #tpu.memory_space<smem>>
    %c16_35 = arith.constant 16 : index
    %180 = memref.load %arg2[%c16_35] : memref<32xf32, #tpu.memory_space<smem>>
    %181 = vector.broadcast %180 : f32 to vector<1x128xf32>
    %182 = arith.mulf %181, %0 : vector<1x128xf32>
    %c16_36 = arith.constant 16 : index
    %183 = memref.load %arg3[%c16_36] : memref<32xf32, #tpu.memory_space<smem>>
    %184 = vector.broadcast %183 : f32 to vector<1x128xf32>
    %185 = arith.addf %182, %184 : vector<1x128xf32>
    %186 = math.tanh %185 : vector<1x128xf32>
    %187 = vector.broadcast %179 : f32 to vector<1x128xf32>
    %188 = arith.mulf %187, %186 : vector<1x128xf32>
    %189 = arith.addf %178, %188 : vector<1x128xf32>
    %c17 = arith.constant 17 : index
    %190 = memref.load %arg4[%c17] : memref<32xf32, #tpu.memory_space<smem>>
    %c17_37 = arith.constant 17 : index
    %191 = memref.load %arg2[%c17_37] : memref<32xf32, #tpu.memory_space<smem>>
    %192 = vector.broadcast %191 : f32 to vector<1x128xf32>
    %193 = arith.mulf %192, %0 : vector<1x128xf32>
    %c17_38 = arith.constant 17 : index
    %194 = memref.load %arg3[%c17_38] : memref<32xf32, #tpu.memory_space<smem>>
    %195 = vector.broadcast %194 : f32 to vector<1x128xf32>
    %196 = arith.addf %193, %195 : vector<1x128xf32>
    %197 = math.tanh %196 : vector<1x128xf32>
    %198 = vector.broadcast %190 : f32 to vector<1x128xf32>
    %199 = arith.mulf %198, %197 : vector<1x128xf32>
    %200 = arith.addf %189, %199 : vector<1x128xf32>
    %c18 = arith.constant 18 : index
    %201 = memref.load %arg4[%c18] : memref<32xf32, #tpu.memory_space<smem>>
    %c18_39 = arith.constant 18 : index
    %202 = memref.load %arg2[%c18_39] : memref<32xf32, #tpu.memory_space<smem>>
    %203 = vector.broadcast %202 : f32 to vector<1x128xf32>
    %204 = arith.mulf %203, %0 : vector<1x128xf32>
    %c18_40 = arith.constant 18 : index
    %205 = memref.load %arg3[%c18_40] : memref<32xf32, #tpu.memory_space<smem>>
    %206 = vector.broadcast %205 : f32 to vector<1x128xf32>
    %207 = arith.addf %204, %206 : vector<1x128xf32>
    %208 = math.tanh %207 : vector<1x128xf32>
    %209 = vector.broadcast %201 : f32 to vector<1x128xf32>
    %210 = arith.mulf %209, %208 : vector<1x128xf32>
    %211 = arith.addf %200, %210 : vector<1x128xf32>
    %c19 = arith.constant 19 : index
    %212 = memref.load %arg4[%c19] : memref<32xf32, #tpu.memory_space<smem>>
    %c19_41 = arith.constant 19 : index
    %213 = memref.load %arg2[%c19_41] : memref<32xf32, #tpu.memory_space<smem>>
    %214 = vector.broadcast %213 : f32 to vector<1x128xf32>
    %215 = arith.mulf %214, %0 : vector<1x128xf32>
    %c19_42 = arith.constant 19 : index
    %216 = memref.load %arg3[%c19_42] : memref<32xf32, #tpu.memory_space<smem>>
    %217 = vector.broadcast %216 : f32 to vector<1x128xf32>
    %218 = arith.addf %215, %217 : vector<1x128xf32>
    %219 = math.tanh %218 : vector<1x128xf32>
    %220 = vector.broadcast %212 : f32 to vector<1x128xf32>
    %221 = arith.mulf %220, %219 : vector<1x128xf32>
    %222 = arith.addf %211, %221 : vector<1x128xf32>
    %c20 = arith.constant 20 : index
    %223 = memref.load %arg4[%c20] : memref<32xf32, #tpu.memory_space<smem>>
    %c20_43 = arith.constant 20 : index
    %224 = memref.load %arg2[%c20_43] : memref<32xf32, #tpu.memory_space<smem>>
    %225 = vector.broadcast %224 : f32 to vector<1x128xf32>
    %226 = arith.mulf %225, %0 : vector<1x128xf32>
    %c20_44 = arith.constant 20 : index
    %227 = memref.load %arg3[%c20_44] : memref<32xf32, #tpu.memory_space<smem>>
    %228 = vector.broadcast %227 : f32 to vector<1x128xf32>
    %229 = arith.addf %226, %228 : vector<1x128xf32>
    %230 = math.tanh %229 : vector<1x128xf32>
    %231 = vector.broadcast %223 : f32 to vector<1x128xf32>
    %232 = arith.mulf %231, %230 : vector<1x128xf32>
    %233 = arith.addf %222, %232 : vector<1x128xf32>
    %c21 = arith.constant 21 : index
    %234 = memref.load %arg4[%c21] : memref<32xf32, #tpu.memory_space<smem>>
    %c21_45 = arith.constant 21 : index
    %235 = memref.load %arg2[%c21_45] : memref<32xf32, #tpu.memory_space<smem>>
    %236 = vector.broadcast %235 : f32 to vector<1x128xf32>
    %237 = arith.mulf %236, %0 : vector<1x128xf32>
    %c21_46 = arith.constant 21 : index
    %238 = memref.load %arg3[%c21_46] : memref<32xf32, #tpu.memory_space<smem>>
    %239 = vector.broadcast %238 : f32 to vector<1x128xf32>
    %240 = arith.addf %237, %239 : vector<1x128xf32>
    %241 = math.tanh %240 : vector<1x128xf32>
    %242 = vector.broadcast %234 : f32 to vector<1x128xf32>
    %243 = arith.mulf %242, %241 : vector<1x128xf32>
    %244 = arith.addf %233, %243 : vector<1x128xf32>
    %c22 = arith.constant 22 : index
    %245 = memref.load %arg4[%c22] : memref<32xf32, #tpu.memory_space<smem>>
    %c22_47 = arith.constant 22 : index
    %246 = memref.load %arg2[%c22_47] : memref<32xf32, #tpu.memory_space<smem>>
    %247 = vector.broadcast %246 : f32 to vector<1x128xf32>
    %248 = arith.mulf %247, %0 : vector<1x128xf32>
    %c22_48 = arith.constant 22 : index
    %249 = memref.load %arg3[%c22_48] : memref<32xf32, #tpu.memory_space<smem>>
    %250 = vector.broadcast %249 : f32 to vector<1x128xf32>
    %251 = arith.addf %248, %250 : vector<1x128xf32>
    %252 = math.tanh %251 : vector<1x128xf32>
    %253 = vector.broadcast %245 : f32 to vector<1x128xf32>
    %254 = arith.mulf %253, %252 : vector<1x128xf32>
    %255 = arith.addf %244, %254 : vector<1x128xf32>
    %c23 = arith.constant 23 : index
    %256 = memref.load %arg4[%c23] : memref<32xf32, #tpu.memory_space<smem>>
    %c23_49 = arith.constant 23 : index
    %257 = memref.load %arg2[%c23_49] : memref<32xf32, #tpu.memory_space<smem>>
    %258 = vector.broadcast %257 : f32 to vector<1x128xf32>
    %259 = arith.mulf %258, %0 : vector<1x128xf32>
    %c23_50 = arith.constant 23 : index
    %260 = memref.load %arg3[%c23_50] : memref<32xf32, #tpu.memory_space<smem>>
    %261 = vector.broadcast %260 : f32 to vector<1x128xf32>
    %262 = arith.addf %259, %261 : vector<1x128xf32>
    %263 = math.tanh %262 : vector<1x128xf32>
    %264 = vector.broadcast %256 : f32 to vector<1x128xf32>
    %265 = arith.mulf %264, %263 : vector<1x128xf32>
    %266 = arith.addf %255, %265 : vector<1x128xf32>
    %c24 = arith.constant 24 : index
    %267 = memref.load %arg4[%c24] : memref<32xf32, #tpu.memory_space<smem>>
    %c24_51 = arith.constant 24 : index
    %268 = memref.load %arg2[%c24_51] : memref<32xf32, #tpu.memory_space<smem>>
    %269 = vector.broadcast %268 : f32 to vector<1x128xf32>
    %270 = arith.mulf %269, %0 : vector<1x128xf32>
    %c24_52 = arith.constant 24 : index
    %271 = memref.load %arg3[%c24_52] : memref<32xf32, #tpu.memory_space<smem>>
    %272 = vector.broadcast %271 : f32 to vector<1x128xf32>
    %273 = arith.addf %270, %272 : vector<1x128xf32>
    %274 = math.tanh %273 : vector<1x128xf32>
    %275 = vector.broadcast %267 : f32 to vector<1x128xf32>
    %276 = arith.mulf %275, %274 : vector<1x128xf32>
    %277 = arith.addf %266, %276 : vector<1x128xf32>
    %c25 = arith.constant 25 : index
    %278 = memref.load %arg4[%c25] : memref<32xf32, #tpu.memory_space<smem>>
    %c25_53 = arith.constant 25 : index
    %279 = memref.load %arg2[%c25_53] : memref<32xf32, #tpu.memory_space<smem>>
    %280 = vector.broadcast %279 : f32 to vector<1x128xf32>
    %281 = arith.mulf %280, %0 : vector<1x128xf32>
    %c25_54 = arith.constant 25 : index
    %282 = memref.load %arg3[%c25_54] : memref<32xf32, #tpu.memory_space<smem>>
    %283 = vector.broadcast %282 : f32 to vector<1x128xf32>
    %284 = arith.addf %281, %283 : vector<1x128xf32>
    %285 = math.tanh %284 : vector<1x128xf32>
    %286 = vector.broadcast %278 : f32 to vector<1x128xf32>
    %287 = arith.mulf %286, %285 : vector<1x128xf32>
    %288 = arith.addf %277, %287 : vector<1x128xf32>
    %c26 = arith.constant 26 : index
    %289 = memref.load %arg4[%c26] : memref<32xf32, #tpu.memory_space<smem>>
    %c26_55 = arith.constant 26 : index
    %290 = memref.load %arg2[%c26_55] : memref<32xf32, #tpu.memory_space<smem>>
    %291 = vector.broadcast %290 : f32 to vector<1x128xf32>
    %292 = arith.mulf %291, %0 : vector<1x128xf32>
    %c26_56 = arith.constant 26 : index
    %293 = memref.load %arg3[%c26_56] : memref<32xf32, #tpu.memory_space<smem>>
    %294 = vector.broadcast %293 : f32 to vector<1x128xf32>
    %295 = arith.addf %292, %294 : vector<1x128xf32>
    %296 = math.tanh %295 : vector<1x128xf32>
    %297 = vector.broadcast %289 : f32 to vector<1x128xf32>
    %298 = arith.mulf %297, %296 : vector<1x128xf32>
    %299 = arith.addf %288, %298 : vector<1x128xf32>
    %c27 = arith.constant 27 : index
    %300 = memref.load %arg4[%c27] : memref<32xf32, #tpu.memory_space<smem>>
    %c27_57 = arith.constant 27 : index
    %301 = memref.load %arg2[%c27_57] : memref<32xf32, #tpu.memory_space<smem>>
    %302 = vector.broadcast %301 : f32 to vector<1x128xf32>
    %303 = arith.mulf %302, %0 : vector<1x128xf32>
    %c27_58 = arith.constant 27 : index
    %304 = memref.load %arg3[%c27_58] : memref<32xf32, #tpu.memory_space<smem>>
    %305 = vector.broadcast %304 : f32 to vector<1x128xf32>
    %306 = arith.addf %303, %305 : vector<1x128xf32>
    %307 = math.tanh %306 : vector<1x128xf32>
    %308 = vector.broadcast %300 : f32 to vector<1x128xf32>
    %309 = arith.mulf %308, %307 : vector<1x128xf32>
    %310 = arith.addf %299, %309 : vector<1x128xf32>
    %c28 = arith.constant 28 : index
    %311 = memref.load %arg4[%c28] : memref<32xf32, #tpu.memory_space<smem>>
    %c28_59 = arith.constant 28 : index
    %312 = memref.load %arg2[%c28_59] : memref<32xf32, #tpu.memory_space<smem>>
    %313 = vector.broadcast %312 : f32 to vector<1x128xf32>
    %314 = arith.mulf %313, %0 : vector<1x128xf32>
    %c28_60 = arith.constant 28 : index
    %315 = memref.load %arg3[%c28_60] : memref<32xf32, #tpu.memory_space<smem>>
    %316 = vector.broadcast %315 : f32 to vector<1x128xf32>
    %317 = arith.addf %314, %316 : vector<1x128xf32>
    %318 = math.tanh %317 : vector<1x128xf32>
    %319 = vector.broadcast %311 : f32 to vector<1x128xf32>
    %320 = arith.mulf %319, %318 : vector<1x128xf32>
    %321 = arith.addf %310, %320 : vector<1x128xf32>
    %c29 = arith.constant 29 : index
    %322 = memref.load %arg4[%c29] : memref<32xf32, #tpu.memory_space<smem>>
    %c29_61 = arith.constant 29 : index
    %323 = memref.load %arg2[%c29_61] : memref<32xf32, #tpu.memory_space<smem>>
    %324 = vector.broadcast %323 : f32 to vector<1x128xf32>
    %325 = arith.mulf %324, %0 : vector<1x128xf32>
    %c29_62 = arith.constant 29 : index
    %326 = memref.load %arg3[%c29_62] : memref<32xf32, #tpu.memory_space<smem>>
    %327 = vector.broadcast %326 : f32 to vector<1x128xf32>
    %328 = arith.addf %325, %327 : vector<1x128xf32>
    %329 = math.tanh %328 : vector<1x128xf32>
    %330 = vector.broadcast %322 : f32 to vector<1x128xf32>
    %331 = arith.mulf %330, %329 : vector<1x128xf32>
    %332 = arith.addf %321, %331 : vector<1x128xf32>
    %c30 = arith.constant 30 : index
    %333 = memref.load %arg4[%c30] : memref<32xf32, #tpu.memory_space<smem>>
    %c30_63 = arith.constant 30 : index
    %334 = memref.load %arg2[%c30_63] : memref<32xf32, #tpu.memory_space<smem>>
    %335 = vector.broadcast %334 : f32 to vector<1x128xf32>
    %336 = arith.mulf %335, %0 : vector<1x128xf32>
    %c30_64 = arith.constant 30 : index
    %337 = memref.load %arg3[%c30_64] : memref<32xf32, #tpu.memory_space<smem>>
    %338 = vector.broadcast %337 : f32 to vector<1x128xf32>
    %339 = arith.addf %336, %338 : vector<1x128xf32>
    %340 = math.tanh %339 : vector<1x128xf32>
    %341 = vector.broadcast %333 : f32 to vector<1x128xf32>
    %342 = arith.mulf %341, %340 : vector<1x128xf32>
    %343 = arith.addf %332, %342 : vector<1x128xf32>
    %c31 = arith.constant 31 : index
    %344 = memref.load %arg4[%c31] : memref<32xf32, #tpu.memory_space<smem>>
    %c31_65 = arith.constant 31 : index
    %345 = memref.load %arg2[%c31_65] : memref<32xf32, #tpu.memory_space<smem>>
    %346 = vector.broadcast %345 : f32 to vector<1x128xf32>
    %347 = arith.mulf %346, %0 : vector<1x128xf32>
    %c31_66 = arith.constant 31 : index
    %348 = memref.load %arg3[%c31_66] : memref<32xf32, #tpu.memory_space<smem>>
    %349 = vector.broadcast %348 : f32 to vector<1x128xf32>
    %350 = arith.addf %347, %349 : vector<1x128xf32>
    %351 = math.tanh %350 : vector<1x128xf32>
    %352 = vector.broadcast %344 : f32 to vector<1x128xf32>
    %353 = arith.mulf %352, %351 : vector<1x128xf32>
    %354 = arith.addf %343, %353 : vector<1x128xf32>
    %c0_67 = arith.constant 0 : index
    %c0_68 = arith.constant 0 : index
    %355 = vector.load %arg6[%c0_67, %c0_68] : memref<1x128xf32, #tpu.memory_space<vmem>>, vector<1x128xf32>
    tpu.vector_store %arg6[%c0_67, %c0_68], %354 {strides = array<i32>} : memref<1x128xf32, #tpu.memory_space<vmem>>, vector<1x128xf32>,
    return
  }
  func.func @transform_0(%arg0: i32) -> (i32, i32) {
    %c0_i32 = arith.constant 0 : i32
    %c0_i32_0 = arith.constant 0 : i32
    return %arg0, %c0_i32 : i32, i32
  }
  func.func @transform_1(%arg0: i32) -> i32 {
    %c0_i32 = arith.constant 0 : i32
    %c0_i32_0 = arith.constant 0 : i32
    return %c0_i32 : i32
  }
  func.func @transform_2(%arg0: i32) -> i32 {
    %c0_i32 = arith.constant 0 : i32
    %c0_i32_0 = arith.constant 0 : i32
    return %c0_i32 : i32
  }
  func.func @transform_3(%arg0: i32) -> i32 {
    %c0_i32 = arith.constant 0 : i32
    %c0_i32_0 = arith.constant 0 : i32
    return %c0_i32 : i32
  }
  func.func @transform_4(%arg0: i32) -> i32 {
    %c0_i32 = arith.constant 0 : i32
    %c0_i32_0 = arith.constant 0 : i32
    return %c0_i32 : i32
  }
  func.func @transform_5(%arg0: i32) -> (i32, i32) {
    %c0_i32 = arith.constant 0 : i32
    %c0_i32_0 = arith.constant 0 : i32
    return %arg0, %c0_i32 : i32, i32
  }
}

</mosaic_0001>

<llo_original>
// kernel: tpu_custom_call.1
$region0: #{tpu_custom_call.1}
  #allocation0 [shape = 'u32[]', space=smem, size = 0x4, offset = 0x4, fixed_abs, tag = 'smem constant byte address 0x4 - core index']
  #allocation1 [shape = 'u32[72,128]{1,0:T(1,128)}', space=vmem, size = 0x9000, scoped, tag = 'internal scratch']
  #allocation2 [shape = 'f32[1]{0:T(128)S(6)}', space=smem, size = 0x200, scoped, tag = 'scoped memory for tpu_custom_call.1']
  %s0 = inlined_call_operand.vmem [shape: f32[1,128], index: 0, kind: input, shape index: {}]
  %s1 = inlined_call_operand.vmem [shape: f32[32], index: 1, kind: input, shape index: {}]
  %s2 = inlined_call_operand.vmem [shape: f32[32], index: 2, kind: input, shape index: {}]
  %s3 = inlined_call_operand.vmem [shape: f32[32], index: 3, kind: input, shape index: {}]
  %s4 = inlined_call_operand.<no memory space> [shape: f32[1], index: 4, kind: input, shape index: {}]
  %s5 = inlined_call_operand.hbm [shape: f32[1,128], index: 5, kind: output, shape index: {}]
  %s6 = sld [smem:[#allocation0]]
  $region42: #{tpu_custom_call.1} parent=0
    _
  %s8 = ssub.s32 1, %s6
  %s9 = scalar_select 0, %s8, %s6
  %10 = sst [smem:[#allocation2]] %s4
  $region1: #{tpu_custom_call.1} parent=0
    #allocation3 [shape = 'u8[512]{0}', space=smem, size = 0x200, scoped, tag = 'input window, operand 1, single buffered']
    #allocation4 [shape = 's32[1]{0}', space=sflag, size = 0x4, scoped, tag = 'scoped memory for tpu_custom_call.1']
    #allocation5 [shape = 's32[1]{0}', space=sflag, size = 0x4, scoped, tag = 'scoped memory for tpu_custom_call.1']
    #allocation6 [shape = 'u8[512]{0}', space=smem, size = 0x200, scoped, tag = 'input window, operand 2, single buffered']
    #allocation7 [shape = 's32[1]{0}', space=sflag, size = 0x4, scoped, tag = 'scoped memory for tpu_custom_call.1']
    #allocation8 [shape = 'u8[512]{0}', space=smem, size = 0x200, scoped, tag = 'input window, operand 3, single buffered']
    #allocation9 [shape = 'u8[512]{0}', space=vmem, size = 0x400, scoped, tag = 'output window, operand 0, single buffered']
    %11 = vsyncpa [#allocation5], 0
    %12 = vsyncpa [#allocation7], 0
    %13 = vsyncpa [#allocation4], 0
    // Predicated region
    $region2: #{tpu_custom_call.1} parent=1 // pred_check
      _
    $region3: #{tpu_custom_call.1} parent=1 // pred_check_branch
      %15 = sbr.rel (0) target = $region5
    $region4: #{tpu_custom_call.1} parent=1 // pred_region
      _
    $region5: #{tpu_custom_call.1} parent=1 // pred_fallthru
      _
    // Predicated region
    $region6: #{tpu_custom_call.1} parent=1 // pred_check
      _
    $region7: #{tpu_custom_call.1} parent=1 // pred_check_branch
      %17 = sbr.rel (0) target = $region9
    $region8: #{tpu_custom_call.1} parent=1 // pred_region
      %19 = vsyncadd [#allocation5], 0
      %s21 = sshll.u32 %s1, 4
      %s22 = int_to_ptr.vmem [resolvable:$true] %s21
      %24 = dma.vmem_to_smem %s22, 16, [#allocation3], [#allocation5]
    $region9: #{tpu_custom_call.1} parent=1 // pred_fallthru
      _
    // Predicated region
    $region10: #{tpu_custom_call.1} parent=1 // pred_check
      _
    $region11: #{tpu_custom_call.1} parent=1 // pred_check_branch
      %26 = sbr.rel (0) target = $region13
    $region12: #{tpu_custom_call.1} parent=1 // pred_region
      %28 = vsyncadd [#allocation7], 0
      %s30 = sshll.u32 %s2, 4
      %s31 = int_to_ptr.vmem [resolvable:$true] %s30
      %33 = dma.vmem_to_smem %s31, 16, [#allocation6], [#allocation7]
    $region13: #{tpu_custom_call.1} parent=1 // pred_fallthru
      _
    // Predicated region
    $region14: #{tpu_custom_call.1} parent=1 // pred_check
      _
    $region15: #{tpu_custom_call.1} parent=1 // pred_check_branch
      %35 = sbr.rel (0) target = $region17
    $region16: #{tpu_custom_call.1} parent=1 // pred_region
      %37 = vsyncadd [#allocation7], 0
      %s39 = sshll.u32 %s3, 4
      %s40 = int_to_ptr.vmem [resolvable:$true] %s39
      %42 = dma.vmem_to_smem %s40, 16, [#allocation8], [#allocation7]
    $region17: #{tpu_custom_call.1} parent=1 // pred_fallthru
      _
    // Predicated region
    $region18: #{tpu_custom_call.1} parent=1 // pred_check
      _
    $region19: #{tpu_custom_call.1} parent=1 // pred_check_branch
      %44 = sbr.rel (0) target = $region21
    $region20: #{tpu_custom_call.1} parent=1 // pred_region
      _
    $region21: #{tpu_custom_call.1} parent=1 // pred_fallthru
      _
    // Predicated region
    $region22: #{tpu_custom_call.1} parent=1 // pred_check
      _
    $region23: #{tpu_custom_call.1} parent=1 // pred_check_branch
      %46 = sbr.rel (0) target = $region25
    $region24: #{tpu_custom_call.1} parent=1 // pred_region
      %48 = dma.done [#allocation5], 16
    $region25: #{tpu_custom_call.1} parent=1 // pred_fallthru
      _
    // Predicated region
    $region26: #{tpu_custom_call.1} parent=1 // pred_check
      _
    $region27: #{tpu_custom_call.1} parent=1 // pred_check_branch
      %50 = sbr.rel (0) target = $region29
    $region28: #{tpu_custom_call.1} parent=1 // pred_region
      %52 = dma.done [#allocation7], 16
    $region29: #{tpu_custom_call.1} parent=1 // pred_fallthru
      _
    // Predicated region
    $region30: #{tpu_custom_call.1} parent=1 // pred_check
      _
    $region31: #{tpu_custom_call.1} parent=1 // pred_check_branch
      %54 = sbr.rel (0) target = $region33
    $region32: #{tpu_custom_call.1} parent=1 // pred_region
      %56 = dma.done [#allocation7], 16
    $region33: #{tpu_custom_call.1} parent=1 // pred_fallthru
      _
    %57 = sfence
    %v58 = vld [vmem:[%s0] sm:$0x1]
    %s59 = sld [smem:[#allocation2]]
    %v60 = vstv %s59
    %s61 = sld [smem:[#allocation8]]
    %s62 = sld [smem:[#allocation3]]
    %v63 = vstv %s62
    %v64 = vmul.f32 %v63, %v58
    %s65 = sld [smem:[#allocation6]]
    %v66 = vstv %s65
    %v67 = vadd.f32 %v64, %v66
    %v68 = vtanh.pop %v67
    %v69 = vstv %s61
    %v70 = vmul.f32 %v69, %v68
    %v71 = vadd.f32 %v60, %v70
    %s72 = sld [smem:[#allocation8 + $0x1]]
    %s73 = sld [smem:[#allocation3 + $0x1]]
    %v74 = vstv %s73
    %v75 = vmul.f32 %v74, %v58
    %s76 = sld [smem:[#allocation6 + $0x1]]
    %v77 = vstv %s76
    %v78 = vadd.f32 %v75, %v77
    %v79 = vtanh.pop %v78
    %v80 = vstv %s72
    %v81 = vmul.f32 %v80, %v79
    %v82 = vadd.f32 %v71, %v81
    %s83 = sld [smem:[#allocation8 + $0x2]]
    %s84 = sld [smem:[#allocation3 + $0x2]]
    %v85 = vstv %s84
    %v86 = vmul.f32 %v85, %v58
    %s87 = sld [smem:[#allocation6 + $0x2]]
    %v88 = vstv %s87
    %v89 = vadd.f32 %v86, %v88
    %v90 = vtanh.pop %v89
    %v91 = vstv %s83
    %v92 = vmul.f32 %v91, %v90
    %v93 = vadd.f32 %v82, %v92
    %s94 = sld [smem:[#allocation8 + $0x3]]
    %s95 = sld [smem:[#allocation3 + $0x3]]
    %v96 = vstv %s95
    %v97 = vmul.f32 %v96, %v58
    %s98 = sld [smem:[#allocation6 + $0x3]]
    %v99 = vstv %s98
    %v100 = vadd.f32 %v97, %v99
    %v101 = vtanh.pop %v100
    %v102 = vstv %s94
    %v103 = vmul.f32 %v102, %v101
    %v104 = vadd.f32 %v93, %v103
    %s105 = sld [smem:[#allocation8 + $0x4]]
    %s106 = sld [smem:[#allocation3 + $0x4]]
    %v107 = vstv %s106
    %v108 = vmul.f32 %v107, %v58
    %s109 = sld [smem:[#allocation6 + $0x4]]
    %v110 = vstv %s109
    %v111 = vadd.f32 %v108, %v110
    %v112 = vtanh.pop %v111
    %v113 = vstv %s105
    %v114 = vmul.f32 %v113, %v112
    %v115 = vadd.f32 %v104, %v114
    %s116 = sld [smem:[#allocation8 + $0x5]]
    %s117 = sld [smem:[#allocation3 + $0x5]]
    %v118 = vstv %s117
    %v119 = vmul.f32 %v118, %v58
    %s120 = sld [smem:[#allocation6 + $0x5]]
    %v121 = vstv %s120
    %v122 = vadd.f32 %v119, %v121
    %v123 = vtanh.pop %v122
    %v124 = vstv %s116
    %v125 = vmul.f32 %v124, %v123
    %v126 = vadd.f32 %v115, %v125
    %s127 = sld [smem:[#allocation8 + $0x6]]
    %s128 = sld [smem:[#allocation3 + $0x6]]
    %v129 = vstv %s128
    %v130 = vmul.f32 %v129, %v58
    %s131 = sld [smem:[#allocation6 + $0x6]]
    %v132 = vstv %s131
    %v133 = vadd.f32 %v130, %v132
    %v134 = vtanh.pop %v133
    %v135 = vstv %s127
    %v136 = vmul.f32 %v135, %v134
    %v137 = vadd.f32 %v126, %v136
    %s138 = sld [smem:[#allocation8 + $0x7]]
    %s139 = sld [smem:[#allocation3 + $0x7]]
    %v140 = vstv %s139
    %v141 = vmul.f32 %v140, %v58
    %s142 = sld [smem:[#allocation6 + $0x7]]
    %v143 = vstv %s142
    %v144 = vadd.f32 %v141, %v143
    %v145 = vtanh.pop %v144
    %v146 = vstv %s138
    %v147 = vmul.f32 %v146, %v145
    %v148 = vadd.f32 %v137, %v147
    %s149 = sld [smem:[#allocation8 + $0x8]]
    %s150 = sld [smem:[#allocation3 + $0x8]]
    %v151 = vstv %s150
    %v152 = vmul.f32 %v151, %v58
    %s153 = sld [smem:[#allocation6 + $0x8]]
    %v154 = vstv %s153
    %v155 = vadd.f32 %v152, %v154
    %v156 = vtanh.pop %v155
    %v157 = vstv %s149
    %v158 = vmul.f32 %v157, %v156
    %v159 = vadd.f32 %v148, %v158
    %s160 = sld [smem:[#allocation8 + $0x9]]
    %s161 = sld [smem:[#allocation3 + $0x9]]
    %v162 = vstv %s161
    %v163 = vmul.f32 %v162, %v58
    %s164 = sld [smem:[#allocation6 + $0x9]]
    %v165 = vstv %s164
    %v166 = vadd.f32 %v163, %v165
    %v167 = vtanh.pop %v166
    %v168 = vstv %s160
    %v169 = vmul.f32 %v168, %v167
    %v170 = vadd.f32 %v159, %v169
    %s171 = sld [smem:[#allocation8 + $0xa]]
    %s172 = sld [smem:[#allocation3 + $0xa]]
    %v173 = vstv %s172
    %v174 = vmul.f32 %v173, %v58
    %s175 = sld [smem:[#allocation6 + $0xa]]
    %v176 = vstv %s175
    %v177 = vadd.f32 %v174, %v176
    %v178 = vtanh.pop %v177
    %v179 = vstv %s171
    %v180 = vmul.f32 %v179, %v178
    %v181 = vadd.f32 %v170, %v180
    %s182 = sld [smem:[#allocation8 + $0xb]]
    %s183 = sld [smem:[#allocation3 + $0xb]]
    %v184 = vstv %s183
    %v185 = vmul.f32 %v184, %v58
    %s186 = sld [smem:[#allocation6 + $0xb]]
    %v187 = vstv %s186
    %v188 = vadd.f32 %v185, %v187
    %v189 = vtanh.pop %v188
    %v190 = vstv %s182
    %v191 = vmul.f32 %v190, %v189
    %v192 = vadd.f32 %v181, %v191
    %s193 = sld [smem:[#allocation8 + $0xc]]
    %s194 = sld [smem:[#allocation3 + $0xc]]
    %v195 = vstv %s194
    %v196 = vmul.f32 %v195, %v58
    %s197 = sld [smem:[#allocation6 + $0xc]]
    %v198 = vstv %s197
    %v199 = vadd.f32 %v196, %v198
    %v200 = vtanh.pop %v199
    %v201 = vstv %s193
    %v202 = vmul.f32 %v201, %v200
    %v203 = vadd.f32 %v192, %v202
    %s204 = sld [smem:[#allocation8 + $0xd]]
    %s205 = sld [smem:[#allocation3 + $0xd]]
    %v206 = vstv %s205
    %v207 = vmul.f32 %v206, %v58
    %s208 = sld [smem:[#allocation6 + $0xd]]
    %v209 = vstv %s208
    %v210 = vadd.f32 %v207, %v209
    %v211 = vtanh.pop %v210
    %v212 = vstv %s204
    %v213 = vmul.f32 %v212, %v211
    %v214 = vadd.f32 %v203, %v213
    %s215 = sld [smem:[#allocation8 + $0xe]]
    %s216 = sld [smem:[#allocation3 + $0xe]]
    %v217 = vstv %s216
    %v218 = vmul.f32 %v217, %v58
    %s219 = sld [smem:[#allocation6 + $0xe]]
    %v220 = vstv %s219
    %v221 = vadd.f32 %v218, %v220
    %v222 = vtanh.pop %v221
    %v223 = vstv %s215
    %v224 = vmul.f32 %v223, %v222
    %v225 = vadd.f32 %v214, %v224
    %s226 = sld [smem:[#allocation8 + $0xf]]
    %s227 = sld [smem:[#allocation3 + $0xf]]
    %v228 = vstv %s227
    %v229 = vmul.f32 %v228, %v58
    %s230 = sld [smem:[#allocation6 + $0xf]]
    %v231 = vstv %s230
    %v232 = vadd.f32 %v229, %v231
    %v233 = vtanh.pop %v232
    %v234 = vstv %s226
    %v235 = vmul.f32 %v234, %v233
    %v236 = vadd.f32 %v225, %v235
    %s237 = sld [smem:[#allocation8 + $0x10]]
    %s238 = sld [smem:[#allocation3 + $0x10]]
    %v239 = vstv %s238
    %v240 = vmul.f32 %v239, %v58
    %s241 = sld [smem:[#allocation6 + $0x10]]
    %v242 = vstv %s241
    %v243 = vadd.f32 %v240, %v242
    %v244 = vtanh.pop %v243
    %v245 = vstv %s237
    %v246 = vmul.f32 %v245, %v244
    %v247 = vadd.f32 %v236, %v246
    %s248 = sld [smem:[#allocation8 + $0x11]]
    %s249 = sld [smem:[#allocation3 + $0x11]]
    %v250 = vstv %s249
    %v251 = vmul.f32 %v250, %v58
    %s252 = sld [smem:[#allocation6 + $0x11]]
    %v253 = vstv %s252
    %v254 = vadd.f32 %v251, %v253
    %v255 = vtanh.pop %v254
    %v256 = vstv %s248
    %v257 = vmul.f32 %v256, %v255
    %v258 = vadd.f32 %v247, %v257
    %s259 = sld [smem:[#allocation8 + $0x12]]
    %s260 = sld [smem:[#allocation3 + $0x12]]
    %v261 = vstv %s260
    %v262 = vmul.f32 %v261, %v58
    %s263 = sld [smem:[#allocation6 + $0x12]]
    %v264 = vstv %s263
    %v265 = vadd.f32 %v262, %v264
    %v266 = vtanh.pop %v265
    %v267 = vstv %s259
    %v268 = vmul.f32 %v267, %v266
    %v269 = vadd.f32 %v258, %v268
    %s270 = sld [smem:[#allocation8 + $0x13]]
    %s271 = sld [smem:[#allocation3 + $0x13]]
    %v272 = vstv %s271
    %v273 = vmul.f32 %v272, %v58
    %s274 = sld [smem:[#allocation6 + $0x13]]
    %v275 = vstv %s274
    %v276 = vadd.f32 %v273, %v275
    %v277 = vtanh.pop %v276
    %v278 = vstv %s270
    %v279 = vmul.f32 %v278, %v277
    %v280 = vadd.f32 %v269, %v279
    %s281 = sld [smem:[#allocation8 + $0x14]]
    %s282 = sld [smem:[#allocation3 + $0x14]]
    %v283 = vstv %s282
    %v284 = vmul.f32 %v283, %v58
    %s285 = sld [smem:[#allocation6 + $0x14]]
    %v286 = vstv %s285
    %v287 = vadd.f32 %v284, %v286
    %v288 = vtanh.pop %v287
    %v289 = vstv %s281
    %v290 = vmul.f32 %v289, %v288
    %v291 = vadd.f32 %v280, %v290
    %s292 = sld [smem:[#allocation8 + $0x15]]
    %s293 = sld [smem:[#allocation3 + $0x15]]
    %v294 = vstv %s293
    %v295 = vmul.f32 %v294, %v58
    %s296 = sld [smem:[#allocation6 + $0x15]]
    %v297 = vstv %s296
    %v298 = vadd.f32 %v295, %v297
    %v299 = vtanh.pop %v298
    %v300 = vstv %s292
    %v301 = vmul.f32 %v300, %v299
    %v302 = vadd.f32 %v291, %v301
    %s303 = sld [smem:[#allocation8 + $0x16]]
    %s304 = sld [smem:[#allocation3 + $0x16]]
    %v305 = vstv %s304
    %v306 = vmul.f32 %v305, %v58
    %s307 = sld [smem:[#allocation6 + $0x16]]
    %v308 = vstv %s307
    %v309 = vadd.f32 %v306, %v308
    %v310 = vtanh.pop %v309
    %v311 = vstv %s303
    %v312 = vmul.f32 %v311, %v310
    %v313 = vadd.f32 %v302, %v312
    %s314 = sld [smem:[#allocation8 + $0x17]]
    %s315 = sld [smem:[#allocation3 + $0x17]]
    %v316 = vstv %s315
    %v317 = vmul.f32 %v316, %v58
    %s318 = sld [smem:[#allocation6 + $0x17]]
    %v319 = vstv %s318
    %v320 = vadd.f32 %v317, %v319
    %v321 = vtanh.pop %v320
    %v322 = vstv %s314
    %v323 = vmul.f32 %v322, %v321
    %v324 = vadd.f32 %v313, %v323
    %s325 = sld [smem:[#allocation8 + $0x18]]
    %s326 = sld [smem:[#allocation3 + $0x18]]
    %v327 = vstv %s326
    %v328 = vmul.f32 %v327, %v58
    %s329 = sld [smem:[#allocation6 + $0x18]]
    %v330 = vstv %s329
    %v331 = vadd.f32 %v328, %v330
    %v332 = vtanh.pop %v331
    %v333 = vstv %s325
    %v334 = vmul.f32 %v333, %v332
    %v335 = vadd.f32 %v324, %v334
    %s336 = sld [smem:[#allocation8 + $0x19]]
    %s337 = sld [smem:[#allocation3 + $0x19]]
    %v338 = vstv %s337
    %v339 = vmul.f32 %v338, %v58
    %s340 = sld [smem:[#allocation6 + $0x19]]
    %v341 = vstv %s340
    %v342 = vadd.f32 %v339, %v341
    %v343 = vtanh.pop %v342
    %v344 = vstv %s336
    %v345 = vmul.f32 %v344, %v343
    %v346 = vadd.f32 %v335, %v345
    %s347 = sld [smem:[#allocation8 + $0x1a]]
    %s348 = sld [smem:[#allocation3 + $0x1a]]
    %v349 = vstv %s348
    %v350 = vmul.f32 %v349, %v58
    %s351 = sld [smem:[#allocation6 + $0x1a]]
    %v352 = vstv %s351
    %v353 = vadd.f32 %v350, %v352
    %v354 = vtanh.pop %v353
    %v355 = vstv %s347
    %v356 = vmul.f32 %v355, %v354
    %v357 = vadd.f32 %v346, %v356
    %s358 = sld [smem:[#allocation8 + $0x1b]]
    %s359 = sld [smem:[#allocation3 + $0x1b]]
    %v360 = vstv %s359
    %v361 = vmul.f32 %v360, %v58
    %s362 = sld [smem:[#allocation6 + $0x1b]]
    %v363 = vstv %s362
    %v364 = vadd.f32 %v361, %v363
    %v365 = vtanh.pop %v364
    %v366 = vstv %s358
    %v367 = vmul.f32 %v366, %v365
    %v368 = vadd.f32 %v357, %v367
    %s369 = sld [smem:[#allocation8 + $0x1c]]
    %s370 = sld [smem:[#allocation3 + $0x1c]]
    %v371 = vstv %s370
    %v372 = vmul.f32 %v371, %v58
    %s373 = sld [smem:[#allocation6 + $0x1c]]
    %v374 = vstv %s373
    %v375 = vadd.f32 %v372, %v374
    %v376 = vtanh.pop %v375
    %v377 = vstv %s369
    %v378 = vmul.f32 %v377, %v376
    %v379 = vadd.f32 %v368, %v378
    %s380 = sld [smem:[#allocation8 + $0x1d]]
    %s381 = sld [smem:[#allocation3 + $0x1d]]
    %v382 = vstv %s381
    %v383 = vmul.f32 %v382, %v58
    %s384 = sld [smem:[#allocation6 + $0x1d]]
    %v385 = vstv %s384
    %v386 = vadd.f32 %v383, %v385
    %v387 = vtanh.pop %v386
    %v388 = vstv %s380
    %v389 = vmul.f32 %v388, %v387
    %v390 = vadd.f32 %v379, %v389
    %s391 = sld [smem:[#allocation8 + $0x1e]]
    %s392 = sld [smem:[#allocation3 + $0x1e]]
    %v393 = vstv %s392
    %v394 = vmul.f32 %v393, %v58
    %s395 = sld [smem:[#allocation6 + $0x1e]]
    %v396 = vstv %s395
    %v397 = vadd.f32 %v394, %v396
    %v398 = vtanh.pop %v397
    %v399 = vstv %s391
    %v400 = vmul.f32 %v399, %v398
    %v401 = vadd.f32 %v390, %v400
    %s402 = sld [smem:[#allocation8 + $0x1f]]
    %s403 = sld [smem:[#allocation3 + $0x1f]]
    %v404 = vstv %s403
    %v405 = vmul.f32 %v404, %v58
    %s406 = sld [smem:[#allocation6 + $0x1f]]
    %v407 = vstv %s406
    %v408 = vadd.f32 %v405, %v407
    %v409 = vtanh.pop %v408
    %v410 = vstv %s402
    %v411 = vmul.f32 %v410, %v409
    %v412 = vadd.f32 %v401, %v411
    %413 = vst [vmem:[#allocation9] sm:$0x1] %v412
    // Predicated region
    $region34: #{tpu_custom_call.1} parent=1 // pred_check
      _
    $region35: #{tpu_custom_call.1} parent=1 // pred_check_branch
      %415 = sbr.rel (0) target = $region37
    $region36: #{tpu_custom_call.1} parent=1 // pred_region
      %417 = vsyncadd [#allocation4], 0
      %s419 = sshll.u32 [#allocation9], 4
      %s420 = int_to_ptr.vmem [resolvable:$true] %s419
      %s421 = sshll.u32 %s5, 4
      %s422 = int_to_ptr.hbm [resolvable:$true] %s421
      %424 = dma.vmem_to_hbm [thread:$0]  %s420, 16, %s422, [#allocation4]
    $region37: #{tpu_custom_call.1} parent=1 // pred_fallthru
      _
    // Predicated region
    $region38: #{tpu_custom_call.1} parent=1 // pred_check
      _
    $region39: #{tpu_custom_call.1} parent=1 // pred_check_branch
      %426 = sbr.rel (0) target = $region41
    $region40: #{tpu_custom_call.1} parent=1 // pred_region
      %428 = dma.done [#allocation4], 16
    $region41: #{tpu_custom_call.1} parent=1 // pred_fallthru
      _
    %429 = vsyncpa [#allocation4], 1
    %430 = vsyncpa [#allocation5], 1
    %431 = vsyncpa [#allocation7], 1

</llo_original>
